<compile_context>
chip_gen: v7x
topology: tpu7x:2x2x1
jax: 0.10.0
libtpu: 0.0.40
codegen_flags: <defaults>
</compile_context>

<pallas_src>
import functools

import jax
import jax.numpy as jnp
from jax.experimental import pallas as pl
from jax.experimental.pallas import tpu as pltpu


def _round_up(x, m):
    return ((x + m - 1) // m) * m


def linear_relu_kernel(x_ref, w_ref, b_ref, o_ref, acc_ref):
    # x_ref: (tm, tk) bf16, w_ref: (tk, tn) bf16, b_ref: (1, tn) f32,
    # o_ref: (tm, tn) f32, acc_ref: (tm, tn) f32 scratch (lives across the k axis).
    @pl.when(pl.program_id(2) == 0)
    def _init():
        acc_ref[...] = jnp.zeros_like(acc_ref)

    acc_ref[...] += jnp.dot(
        x_ref[...], w_ref[...], preferred_element_type=jnp.float32
    )

    @pl.when(pl.program_id(2) == pl.num_programs(2) - 1)
    def _finalize():
        # Bias add + ReLU in f32 on the accumulator, fused into the writeback.
        o_ref[...] = jnp.maximum(acc_ref[...] + b_ref[...], 0.0).astype(o_ref.dtype)


def prepare_params(w, b, compute_dtype=jnp.bfloat16):
    """One-time (init-time) parameter prep.

    w: [out_features, in_features] (PyTorch Linear layout), b: [out_features].
    Returns (w_kn, b2): weight as [K_pad, N_pad] in bf16 (transposed, zero-padded
    to lane multiples of 128) and bias as [1, N_pad] f32.
    """
    n, k = w.shape
    kp = _round_up(k, 128)
    np_ = _round_up(n, 128)
    w_kn = jnp.zeros((kp, np_), dtype=compute_dtype)
    w_kn = w_kn.at[:k, :n].set(w.T.astype(compute_dtype))
    b2 = jnp.zeros((1, np_), dtype=jnp.float32)
    b2 = b2.at[0, :n].set(b.astype(jnp.float32))
    return w_kn, b2


@functools.partial(
    jax.jit, static_argnames=("out_features", "tm", "tn", "tk")
)
def linear_relu(x, w_kn, b2, out_features, tm=256, tn=512, tk=512):
    """x: [B, K] (any float dtype), w_kn: [K_pad, N_pad] bf16, b2: [1, N_pad] f32.
    Returns relu(x @ W^T + b) as [B, out_features] f32."""
    B, K = x.shape
    Kp, Np = w_kn.shape

    # Clamp tile sizes to the (padded) problem; keep sublane/lane alignment.
    tm = min(tm, _round_up(B, 8))
    tn = min(tn, Np)          # Np is a multiple of 128
    tk = min(tk, Kp)          # Kp is a multiple of 128
    Mp = _round_up(B, tm)

    # Zero-pad activations once per call (padded K columns contribute exactly 0).
    x_p = jnp.zeros((Mp, Kp), dtype=w_kn.dtype)
    x_p = x_p.at[:B, :K].set(x.astype(w_kn.dtype))

    grid = (Mp // tm, Np // tn, Kp // tk)

    out = pl.pallas_call(
        linear_relu_kernel,
        out_shape=jax.ShapeDtypeStruct((Mp, Np), jnp.float32),
        grid_spec=pltpu.PrefetchScalarGridSpec(
            num_scalar_prefetch=0,
            grid=grid,
            in_specs=[
                pl.BlockSpec((tm, tk), lambda i, j, k: (i, k)),
                pl.BlockSpec((tk, tn), lambda i, j, k: (k, j)),
                pl.BlockSpec((1, tn), lambda i, j, k: (0, j)),
            ],
            out_specs=pl.BlockSpec((tm, tn), lambda i, j, k: (i, j)),
            scratch_shapes=[pltpu.VMEM((tm, tn), jnp.float32)],
        ),
        compiler_params=pltpu.CompilerParams(
            # M and N independent -> parallel (enables 2-TC sharding on v7x);
            # K is the reduction -> arbitrary.
            dimension_semantics=("parallel", "parallel", "arbitrary"),
            # Explicit scoped-VMEM budget; default tiles (bf16, <=256x512x512 +
            # double-buffering + f32 acc) fit comfortably on v5e/v6e/v7x.
            vmem_limit_bytes=32 * 1024 * 1024,
        ),
    )(x_p, w_kn, b2)

    # Slice away M/N padding.
    return out[:B, :out_features]


if __name__ == "__main__":
    key = jax.random.PRNGKey(0)
    k_x, k_w, k_b = jax.random.split(key, 3)

    B = 8
    in_features = 32
    out_features = 64

    # Deterministic params, mimicking PyTorch Linear default init (+-1/sqrt(fan_in)).
    bound = 1.0 / (in_features ** 0.5)
    w = jax.random.uniform(k_w, (out_features, in_features),
                           minval=-bound, maxval=bound, dtype=jnp.float32)
    b = jax.random.uniform(k_b, (out_features,),
                           minval=-bound, maxval=bound, dtype=jnp.float32)
    x = jax.random.normal(k_x, (B, in_features), dtype=jnp.float32)

    # Init-time prep (transpose + pad + bf16 cast happens once, outside hot path).
    w_kn, b2 = prepare_params(w, b)

    out = linear_relu(x, w_kn, b2, out_features)
    out = jax.block_until_ready(out)

    # Reference with identical numerics: bf16 operands, f32 accumulation, f32 epilogue.
    ref = jnp.maximum(
        jnp.dot(x.astype(jnp.bfloat16), w.T.astype(jnp.bfloat16),
                preferred_element_type=jnp.float32) + b,
        0.0,
    )
    assert out.shape == (B, out_features)
    assert jnp.allclose(out, ref, atol=1e-4, rtol=1e-4), "mismatch vs reference"

    # Loose sanity check against a pure-f32 reference as well.
    ref_f32 = jnp.maximum(x @ w.T + b, 0.0)
    assert jnp.allclose(out, ref_f32, atol=5e-2, rtol=5e-2)

    print("KERNEL_OK")
</pallas_src>

<mosaic_0001>
module attributes {stable_mosaic.version = 11 : i64} {
  func.func @linear_relu_kernel(%arg0: i32, %arg1: i32, %arg2: i32, %arg3: memref<8x128xbf16, #tpu.memory_space<vmem>>, %arg4: memref<128x128xbf16, #tpu.memory_space<vmem>>, %arg5: memref<1x128xf32, #tpu.memory_space<vmem>>, %arg6: memref<8x128xf32, #tpu.memory_space<vmem>>, %arg7: memref<8x128xf32, #tpu.memory_space<vmem>>) attributes {dimension_semantics = [#tpu.dimension_semantics<parallel>, #tpu.dimension_semantics<parallel>, #tpu.dimension_semantics<arbitrary>], iteration_bounds = array<i64: 1, 1, 1>, scalar_prefetch = 0 : i64, scratch_operands = 1 : i64, tpu.core_type = #tpu.core_type<tc>, window_params = [{transform_indices = @transform_0, window_bounds = array<i64: 8, 128>}, {transform_indices = @transform_1, window_bounds = array<i64: 128, 128>}, {transform_indices = @transform_2, window_bounds = array<i64: 1, 128>}, {transform_indices = @transform_3, window_bounds = array<i64: 8, 128>}]} {
    %c0_i32 = arith.constant 0 : i32
    %0 = arith.cmpi eq, %arg2, %c0_i32 : i32
    %1 = arith.extui %0 : i1 to i32
    %c0_i32_0 = arith.constant 0 : i32
    %2 = arith.cmpi ne, %1, %c0_i32_0 : i32
    scf.if %2 {
      %cst_10 = arith.constant 0.000000e+00 : f32
      %12 = vector.broadcast %cst_10 : f32 to vector<8x128xf32>
      %c0_11 = arith.constant 0 : index
      %c0_12 = arith.constant 0 : index
      %13 = vector.load %arg7[%c0_11, %c0_12] : memref<8x128xf32, #tpu.memory_space<vmem>>, vector<8x128xf32>
      tpu.vector_store %arg7[%c0_11, %c0_12], %12 {strides = array<i32>} : memref<8x128xf32, #tpu.memory_space<vmem>>, vector<8x128xf32>,
    } else {
    }
    %c0 = arith.constant 0 : index
    %c0_1 = arith.constant 0 : index
    %3 = vector.load %arg7[%c0, %c0_1] : memref<8x128xf32, #tpu.memory_space<vmem>>, vector<8x128xf32>
    %c0_2 = arith.constant 0 : index
    %c0_3 = arith.constant 0 : index
    %4 = vector.load %arg3[%c0_2, %c0_3] : memref<8x128xbf16, #tpu.memory_space<vmem>>, vector<8x128xbf16>
    %c0_4 = arith.constant 0 : index
    %c0_5 = arith.constant 0 : index
    %5 = vector.load %arg4[%c0_4, %c0_5] : memref<128x128xbf16, #tpu.memory_space<vmem>>, vector<128x128xbf16>
    %cst = arith.constant dense<0.000000e+00> : vector<8x128xf32>
    %6 = tpu.matmul %4, %5, %cst {dimension_numbers = #tpu.dot_dimension_numbers<[1], [0], [0], [1], [0, 0, 1, 1], [], []>} : vector<8x128xbf16>, vector<128x128xbf16>, vector<8x128xf32> -> vector<8x128xf32>
    %7 = arith.addf %3, %6 : vector<8x128xf32>
    %c0_6 = arith.constant 0 : index
    %c0_7 = arith.constant 0 : index
    %8 = vector.load %arg7[%c0_6, %c0_7] : memref<8x128xf32, #tpu.memory_space<vmem>>, vector<8x128xf32>
    tpu.vector_store %arg7[%c0_6, %c0_7], %7 {strides = array<i32>} : memref<8x128xf32, #tpu.memory_space<vmem>>, vector<8x128xf32>,
    %c0_i32_8 = arith.constant 0 : i32
    %9 = arith.cmpi eq, %arg2, %c0_i32_8 : i32
    %10 = arith.extui %9 : i1 to i32
    %c0_i32_9 = arith.constant 0 : i32
    %11 = arith.cmpi ne, %10, %c0_i32_9 : i32
    scf.if %11 {
      %c0_10 = arith.constant 0 : index
      %c0_11 = arith.constant 0 : index
      %12 = vector.load %arg7[%c0_10, %c0_11] : memref<8x128xf32, #tpu.memory_space<vmem>>, vector<8x128xf32>
      %c0_12 = arith.constant 0 : index
      %c0_13 = arith.constant 0 : index
      %13 = vector.load %arg5[%c0_12, %c0_13] : memref<1x128xf32, #tpu.memory_space<vmem>>, vector<1x128xf32>
      %14 = vector.broadcast %13 : vector<1x128xf32> to vector<8x128xf32>
      %15 = arith.addf %12, %14 : vector<8x128xf32>
      %cst_14 = arith.constant 0.000000e+00 : f32
      %16 = vector.broadcast %cst_14 : f32 to vector<8x128xf32>
      %17 = arith.maximumf %15, %16 : vector<8x128xf32>
      %c0_15 = arith.constant 0 : index
      %c0_16 = arith.constant 0 : index
      %18 = vector.load %arg6[%c0_15, %c0_16] : memref<8x128xf32, #tpu.memory_space<vmem>>, vector<8x128xf32>
      tpu.vector_store %arg6[%c0_15, %c0_16], %17 {strides = array<i32>} : memref<8x128xf32, #tpu.memory_space<vmem>>, vector<8x128xf32>,
    } else {
    }
    return
  }
  func.func @transform_0(%arg0: i32, %arg1: i32, %arg2: i32) -> (i32, i32) {
    %c0_i32 = arith.constant 0 : i32
    return %arg0, %arg2 : i32, i32
  }
  func.func @transform_1(%arg0: i32, %arg1: i32, %arg2: i32) -> (i32, i32) {
    %c0_i32 = arith.constant 0 : i32
    return %arg2, %arg1 : i32, i32
  }
  func.func @transform_2(%arg0: i32, %arg1: i32, %arg2: i32) -> (i32, i32) {
    %c0_i32 = arith.constant 0 : i32
    %c0_i32_0 = arith.constant 0 : i32
    return %c0_i32, %arg1 : i32, i32
  }
  func.func @transform_3(%arg0: i32, %arg1: i32, %arg2: i32) -> (i32, i32) {
    %c0_i32 = arith.constant 0 : i32
    return %arg0, %arg1 : i32, i32
  }
}

</mosaic_0001>

<llo_original>
// kernel: linear_relu.1
$region0: #{linear_relu.1}
  #allocation0 [shape = 'u32[]', space=smem, size = 0x4, offset = 0x4, fixed_abs, tag = 'smem constant byte address 0x4 - core index']
  #allocation1 [shape = 'u32[144,128]{1,0:T(1,128)}', space=vmem, size = 0x12000, scoped, tag = 'internal scratch']
  #allocation2 [shape = 'f32[8,128]{1,0:T(8,128)}', space=vmem, size = 0x1000, scoped, tag = 'scratch operand']
  %s0 = inlined_call_operand.vmem [shape: bf16[8,128], index: 0, kind: input, shape index: {}]
  %s1 = inlined_call_operand.hbm [shape: bf16[128,128], index: 1, kind: input, shape index: {}]
  %s2 = inlined_call_operand.vmem [shape: f32[1,128], index: 2, kind: input, shape index: {}]
  %s3 = inlined_call_operand.hbm [shape: f32[8,128], index: 3, kind: output, shape index: {}]
  %s4 = sld [smem:[#allocation0]]
  $region34: #{linear_relu.1} parent=0
    _
  %s6 = ssub.s32 1, %s4
  %s7 = scalar_select 0, %s6, %s4
  $region1: #{linear_relu.1} parent=0
    #allocation3 [shape = 'u8[32768]{0}', space=vmem, size = 0x8000, scoped, tag = 'input window, operand 1, single buffered']
    #allocation4 [shape = 's32[1]{0}', space=sflag, size = 0x4, scoped, tag = 'scoped memory for linear_relu.1']
    #allocation5 [shape = 's32[1]{0}', space=sflag, size = 0x4, scoped, tag = 'scoped memory for linear_relu.1']
    #allocation6 [shape = 'u8[4096]{0}', space=vmem, size = 0x1000, scoped, tag = 'output window, operand 0, single buffered']
    %8 = vsyncpa [#allocation4], 0
    %9 = vsyncpa [#allocation5], 0
    // Predicated region
    $region2: #{linear_relu.1} parent=1 // pred_check
      _
    $region3: #{linear_relu.1} parent=1 // pred_check_branch
      %11 = sbr.rel (0) target = $region5
    $region4: #{linear_relu.1} parent=1 // pred_region
      _
    $region5: #{linear_relu.1} parent=1 // pred_fallthru
      _
    // Predicated region
    $region6: #{linear_relu.1} parent=1 // pred_check
      _
    $region7: #{linear_relu.1} parent=1 // pred_check_branch
      %13 = sbr.rel (0) target = $region9
    $region8: #{linear_relu.1} parent=1 // pred_region
      %s15 = ssub.s32 1024, 1024
      %16 = vsyncadd [#allocation4], %s15
      %s17 = sshll.u32 [#allocation3], 4
      %s18 = int_to_ptr.vmem [resolvable:$true] %s17
      %23 = dma.hbm_to_vmem [thread:$0]  %s1, 1024, %s18, [#allocation4], 64, 64, 4
    $region9: #{linear_relu.1} parent=1 // pred_fallthru
      _
    // Predicated region
    $region10: #{linear_relu.1} parent=1 // pred_check
      _
    $region11: #{linear_relu.1} parent=1 // pred_check_branch
      %25 = sbr.rel (0) target = $region13
    $region12: #{linear_relu.1} parent=1 // pred_region
      _
    $region13: #{linear_relu.1} parent=1 // pred_fallthru
      _
    // Predicated region
    $region14: #{linear_relu.1} parent=1 // pred_check
      _
    $region15: #{linear_relu.1} parent=1 // pred_check_branch
      %27 = sbr.rel (0) target = $region17
    $region16: #{linear_relu.1} parent=1 // pred_region
      %28 = dma.done [#allocation4], 1024
    $region17: #{linear_relu.1} parent=1 // pred_fallthru
      _
    %p30 = scmp.eq.s32.totalorder 0, 0
    // Predicated region
    $region18: #{linear_relu.1} parent=1 // pred_check
      %p31 = pneg %p30
    $region19: #{linear_relu.1} parent=1 // pred_check_branch
      %33 = sbr.rel (%p31) target = $region21
    $region20: #{linear_relu.1} parent=1 // pred_region
      %34 = vst [vmem:[#allocation2] sm:$0xff] 0.0
    $region21: #{linear_relu.1} parent=1 // pred_fallthru
      _
    %v35 = vld [vmem:[#allocation2] sm:$0xff]
    %v36 = vld [vmem:[%s0] sm:$0xf]
    %v37 = vld [vmem:[#allocation3] sm:$0xf]
    %v38 = vld [vmem:[#allocation3 + $0x4] sm:$0xf]
    %v39 = vld [vmem:[#allocation3 + $0x8] sm:$0xf]
    %v40 = vld [vmem:[#allocation3 + $0xc] sm:$0xf]
    %v41 = vld [vmem:[#allocation3 + $0x10] sm:$0xf]
    %v42 = vld [vmem:[#allocation3 + $0x14] sm:$0xf]
    %v43 = vld [vmem:[#allocation3 + $0x18] sm:$0xf]
    %v44 = vld [vmem:[#allocation3 + $0x1c] sm:$0xf]
    %v45 = vld [vmem:[#allocation3 + $0x20] sm:$0xf]
    %v46 = vld [vmem:[#allocation3 + $0x24] sm:$0xf]
    %v47 = vld [vmem:[#allocation3 + $0x28] sm:$0xf]
    %v48 = vld [vmem:[#allocation3 + $0x2c] sm:$0xf]
    %v49 = vld [vmem:[#allocation3 + $0x30] sm:$0xf]
    %v50 = vld [vmem:[#allocation3 + $0x34] sm:$0xf]
    %v51 = vld [vmem:[#allocation3 + $0x38] sm:$0xf]
    %v52 = vld [vmem:[#allocation3 + $0x3c] sm:$0xf]
    %v69 = vunpack.c.l.b16 %v37
    %v70 = vunpack.c.l.b16 %v38
    %v71 = vunpack.c.l.b16 %v39
    %v72 = vunpack.c.l.b16 %v40
    %v73 = vunpack.c.l.b16 %v41
    %v74 = vunpack.c.l.b16 %v42
    %v75 = vunpack.c.l.b16 %v43
    %v76 = vunpack.c.l.b16 %v44
    %v77 = vunpack.c.l.b16 %v45
    %v78 = vunpack.c.l.b16 %v46
    %v79 = vunpack.c.l.b16 %v47
    %v80 = vunpack.c.l.b16 %v48
    %v81 = vunpack.c.l.b16 %v49
    %v82 = vunpack.c.l.b16 %v50
    %v83 = vunpack.c.l.b16 %v51
    %v84 = vunpack.c.l.b16 %v52
    %v85 = vpack.c.b16 %v70, %v69
    %v86 = vpack.c.b16 %v72, %v71
    %v87 = vpack.c.b16 %v74, %v73
    %v88 = vpack.c.b16 %v76, %v75
    %v89 = vpack.c.b16 %v78, %v77
    %v90 = vpack.c.b16 %v80, %v79
    %v91 = vpack.c.b16 %v82, %v81
    %v92 = vpack.c.b16 %v84, %v83
    %101 = vmatprep.subr.bf16.mxu0 0
    %102 = vmatpush1.bf16.msra.mxu0 %v85
    %103 = vmatprep.subr.bf16.mxu0 0
    %104 = vmatpush1.bf16.msra.mxu0 %v86
    %105 = vmatprep.subr.bf16.mxu0 0
    %106 = vmatpush1.bf16.msra.mxu0 %v87
    %107 = vmatprep.subr.bf16.mxu0 0
    %108 = vmatpush1.bf16.msra.mxu0 %v88
    %109 = vmatprep.subr.bf16.mxu0 0
    %110 = vmatpush1.bf16.msra.mxu0 %v89
    %111 = vmatprep.subr.bf16.mxu0 0
    %112 = vmatpush1.bf16.msra.mxu0 %v90
    %113 = vmatprep.subr.bf16.mxu0 0
    %114 = vmatpush1.bf16.msra.mxu0 %v91
    %115 = vmatprep.subr.bf16.mxu0 0
    %116 = vmatpush1.bf16.msra.mxu0 %v92
    %117 = vmatprep.subr.bf16.mxu0 0
    %118 = vmatpush1.bf16.msra.mxu0 0
    %119 = vmatprep.subr.bf16.mxu0 0
    %120 = vmatpush1.bf16.msra.mxu0 0
    %121 = vmatprep.subr.bf16.mxu0 0
    %122 = vmatpush1.bf16.msra.mxu0 0
    %123 = vmatprep.subr.bf16.mxu0 0
    %124 = vmatpush1.bf16.msra.mxu0 0
    %125 = vmatprep.subr.bf16.mxu0 0
    %126 = vmatpush1.bf16.msra.mxu0 0
    %127 = vmatprep.subr.bf16.mxu0 0
    %128 = vmatpush1.bf16.msra.mxu0 0
    %129 = vmatprep.subr.bf16.mxu0 0
    %130 = vmatpush1.bf16.msra.mxu0 0
    %131 = vmatprep.subr.bf16.mxu0 0
    %132 = vmatpush1.bf16.msra.mxu0 0
    %133 = vmatprep.mubr.bf16.mxu0 0
    %134 = vmatmul.mubr.bf16.gmra.mrb[0].mxu0 %v36
    %v135 = vpop.f32.mrb[0].mxu0
    %v136 = vadd.f32 0.0, %v135
    %v137 = vpop.f32.mrb[0].mxu0
    %v138 = vpop.f32.mrb[0].mxu0
    %v139 = vpop.f32.mrb[0].mxu0
    %140 = vdwg.mxu0
    %v141 = vadd.f32 %v35, %v136
    %142 = vst [vmem:[#allocation2] sm:$0xff] %v141
    // Predicated region
    $region22: #{linear_relu.1} parent=1 // pred_check
      %p143 = pneg %p30
    $region23: #{linear_relu.1} parent=1 // pred_check_branch
      %145 = sbr.rel (%p143) target = $region25
    $region24: #{linear_relu.1} parent=1 // pred_region
      %v146 = vld [vmem:[#allocation2] sm:$0xff]
      %v147 = vld [vmem:[%s2] sm:$0x1]
      %v149 = vlaneseq
      %v150 = vshrl.u32 %v149, 7
      %v151 = vsub.s32 0, %v150
      %v152 = vrot.slane %v147, %v151
      %v154 = vadd.f32 %v146, %v152
      %v155 = vmax.f32 %v154, 0.0
      %156 = vst [vmem:[#allocation6] sm:$0xff] %v155
    $region25: #{linear_relu.1} parent=1 // pred_fallthru
      _
    // Predicated region
    $region26: #{linear_relu.1} parent=1 // pred_check
      _
    $region27: #{linear_relu.1} parent=1 // pred_check_branch
      %158 = sbr.rel (0) target = $region29
    $region28: #{linear_relu.1} parent=1 // pred_region
      %s160 = ssub.s32 128, 128
      %161 = vsyncadd [#allocation5], %s160
      %s163 = sshll.u32 [#allocation6], 4
      %s164 = int_to_ptr.vmem [resolvable:$true] %s163
      %166 = dma.vmem_to_hbm [thread:$0]  %s164, 128, %s3, [#allocation5]
    $region29: #{linear_relu.1} parent=1 // pred_fallthru
      _
    // Predicated region
    $region30: #{linear_relu.1} parent=1 // pred_check
      _
    $region31: #{linear_relu.1} parent=1 // pred_check_branch
      %168 = sbr.rel (0) target = $region33
    $region32: #{linear_relu.1} parent=1 // pred_region
      %169 = dma.done [#allocation5], 128
    $region33: #{linear_relu.1} parent=1 // pred_fallthru
      _
    %170 = vsyncpa [#allocation4], 1
    %171 = vsyncpa [#allocation5], 1

</llo_original>
